<compile_context>
chip_gen: v7x
topology: tpu7x:2x2x1
jax: 0.10.0
libtpu: 0.0.40
codegen_flags: <defaults>
</compile_context>

<pallas_src>
import functools

import jax
import jax.numpy as jnp
from jax.experimental import pallas as pl
from jax.experimental.pallas import tpu as pltpu


# ---------------------------------------------------------------------------
# Kernels
# ---------------------------------------------------------------------------
def _proj_kernel_single(x_ref, w_ref, b_ref, o_ref):
    # Whole reduction in one tile: no K grid axis, no accumulator, no pl.when.
    o_ref[...] = (
        jnp.dot(x_ref[...], w_ref[...], preferred_element_type=jnp.float32)
        + b_ref[...]
    ).astype(o_ref.dtype)


def _proj_kernel_kdirect(x_ref, w_ref, b_ref, o_ref):
    # K grid axis, f32 output: accumulate straight into the VMEM-resident
    # output block (its index_map ignores k), no scratch needed.
    k = pl.program_id(2)

    @pl.when(k == 0)
    def _():
        o_ref[...] = jnp.zeros_like(o_ref)

    o_ref[...] += jnp.dot(
        x_ref[...], w_ref[...], preferred_element_type=jnp.float32
    )

    @pl.when(k == pl.num_programs(2) - 1)
    def _():
        o_ref[...] += b_ref[...]


def _proj_kernel_kacc(x_ref, w_ref, b_ref, o_ref, acc_ref):
    # K grid axis, narrow (bf16) output: keep an f32 VMEM accumulator and
    # only cast + add bias at the finalize step.
    k = pl.program_id(2)

    @pl.when(k == 0)
    def _():
        acc_ref[...] = jnp.zeros_like(acc_ref)

    acc_ref[...] += jnp.dot(
        x_ref[...], w_ref[...], preferred_element_type=jnp.float32
    )

    @pl.when(k == pl.num_programs(2) - 1)
    def _():
        o_ref[...] = (acc_ref[...] + b_ref[...]).astype(o_ref.dtype)


# ---------------------------------------------------------------------------
# Helpers
# ---------------------------------------------------------------------------
def _round_up(x, m):
    return ((x + m - 1) // m) * m


def _default_config():
    """Per-generation tile / VMEM defaults (roofline + VMEM-budget driven)."""
    try:
        kind = jax.devices()[0].device_kind.lower()
    except Exception:  # pragma: no cover
        kind = ""
    if "v7" in kind:
        # 64 MiB VMEM per TC, ~3.2 TB/s HBM -> moderate tiles already MXU-bound.
        return dict(tm=512, tn=1024, tk=1024, vmem_limit=48 * 1024 * 1024)
    if "v6" in kind or "trillium" in kind:
        # Needs ~650-700 flops/byte -> big tiles; 128 MiB VMEM easily fits.
        return dict(tm=1024, tn=2048, tk=1024, vmem_limit=96 * 1024 * 1024)
    # v5e / other: ~240 flops/byte target; larger tk cuts accumulator RMW passes.
    return dict(tm=512, tn=1024, tk=1024, vmem_limit=64 * 1024 * 1024)


@functools.partial(
    jax.jit,
    static_argnames=("tm", "tn", "tk", "out_dtype", "vmem_limit", "D", "V"),
)
def _projection_fwd(x2d, w_padded, b_padded, *, tm, tn, tk, out_dtype,
                    vmem_limit, D, V):
    """x2d: (M, D) any float dtype.  w_padded: (Kp, Vp) bf16.  b_padded: (1, Vp) f32."""
    M = x2d.shape[0]
    Kp, Vp = w_padded.shape
    Mp = _round_up(M, tm)

    # Only the activation is cast/padded per call (weight prep is hoisted).
    x_p = jnp.pad(x2d.astype(jnp.bfloat16), ((0, Mp - M), (0, Kp - D)))

    ni = Mp // tm   # M tiles
    nj = Vp // tn   # vocab tiles
    nk = Kp // tk   # reduction tiles

    out_bytes = jnp.dtype(out_dtype).itemsize
    cost = pl.CostEstimate(
        flops=2 * M * D * V,
        transcendentals=0,
        # Actual streamed traffic: x re-read per vocab tile, W re-read per M tile.
        bytes_accessed=nj * M * D * 2 + ni * D * V * 2 + M * V * out_bytes + V * 4,
    )

    if nk == 1:
        # Canonical LM-head path: whole reduction in VMEM, 2-D grid.
        grid = (nj, ni)                       # vocab outermost -> megacore shards W
        kernel = _proj_kernel_single
        in_specs = [
            pl.BlockSpec((tm, tk), lambda j, i: (i, 0)),   # x tile
            pl.BlockSpec((tk, tn), lambda j, i: (0, j)),   # weight tile
            pl.BlockSpec((1, tn), lambda j, i: (0, j)),    # bias tile
        ]
        out_spec = pl.BlockSpec((tm, tn), lambda j, i: (i, j))
        scratch = []
        semantics = ("parallel", "parallel")
    else:
        grid = (nj, ni, nk)                   # K innermost (reduction last)
        in_specs = [
            pl.BlockSpec((tm, tk), lambda j, i, k: (i, k)),
            pl.BlockSpec((tk, tn), lambda j, i, k: (k, j)),
            pl.BlockSpec((1, tn), lambda j, i, k: (0, j)),
        ]
        out_spec = pl.BlockSpec((tm, tn), lambda j, i, k: (i, j))
        semantics = ("parallel", "parallel", "arbitrary")
        if jnp.dtype(out_dtype) == jnp.dtype(jnp.float32):
            kernel = _proj_kernel_kdirect
            scratch = []
        else:
            kernel = _proj_kernel_kacc
            scratch = [pltpu.VMEM((tm, tn), jnp.float32)]

    out2d = pl.pallas_call(
        kernel,
        out_shape=jax.ShapeDtypeStruct((Mp, Vp), out_dtype),
        grid_spec=pltpu.PrefetchScalarGridSpec(
            num_scalar_prefetch=0,
            grid=grid,
            in_specs=in_specs,
            out_specs=out_spec,
            scratch_shapes=scratch,
        ),
        compiler_params=pltpu.CompilerParams(
            dimension_semantics=semantics,
            vmem_limit_bytes=vmem_limit,
        ),
        cost_estimate=cost,
    )(x_p, w_padded, b_padded)

    return out2d[:M, :V]


# ---------------------------------------------------------------------------
# Module-equivalent wrapper
# ---------------------------------------------------------------------------
class Projection:
    """Pallas-TPU equivalent of `nn.Linear(d_model, vocab_size)`.

    Weight is stored pre-transposed, bf16-cast and zero-padded ONCE at init
    (hoisted out of the per-call path).  Inputs are cast to bf16 per call and
    the matmul accumulates in f32 on the MXU; output dtype defaults to bf16
    (set out_dtype=jnp.float32 for f32 logits).  Results therefore match
    nn.Linear at bf16-input precision, not exact f32.
    """

    def __init__(self, d_model, vocab_size, *, key, out_dtype=jnp.bfloat16,
                 tm=None, tn=None, tk=None):
        cfg = _default_config()
        self.d_model = d_model
        self.vocab_size = vocab_size
        self.out_dtype = jnp.dtype(out_dtype)
        self.vmem_limit = cfg["vmem_limit"]

        # Tile sizes, clamped (lane-aligned) to the padded problem dims.
        self.tm = tm if tm is not None else cfg["tm"]
        self.tn = min(tn if tn is not None else cfg["tn"], _round_up(vocab_size, 128))
        self.tk = min(tk if tk is not None else cfg["tk"], _round_up(d_model, 128))

        # nn.Linear default init: U(-1/sqrt(d_model), 1/sqrt(d_model)).
        kw, kb = jax.random.split(key)
        bound = 1.0 / (d_model ** 0.5)
        w = jax.random.uniform(kw, (vocab_size, d_model), jnp.float32, -bound, bound)
        b = jax.random.uniform(kb, (vocab_size,), jnp.float32, -bound, bound)
        self.set_weights(w, b)

    def set_weights(self, w, b):
        """w: (vocab, d_model) as stored by nn.Linear; b: (vocab,).
        Pre-cast to bf16 and pre-pad to tile multiples once."""
        D, V = self.d_model, self.vocab_size
        Kp = _round_up(D, self.tk)
        Vp = _round_up(V, self.tn)
        w_t = jnp.asarray(w).T.astype(jnp.bfloat16)                   # (D, V)
        self.w_padded = jnp.pad(w_t, ((0, Kp - D), (0, Vp - V)))      # (Kp, Vp) bf16
        self.b_padded = jnp.pad(
            jnp.asarray(b).astype(jnp.float32), (0, Vp - V)
        ).reshape(1, Vp)                                              # (1, Vp) f32

    def __call__(self, x):
        lead = x.shape[:-1]
        D = x.shape[-1]
        M = 1
        for s in lead:
            M *= s
        x2d = x.reshape(M, D)
        tm = min(self.tm, _round_up(M, 128))
        out2d = _projection_fwd(
            x2d, self.w_padded, self.b_padded,
            tm=tm, tn=self.tn, tk=self.tk,
            out_dtype=self.out_dtype, vmem_limit=self.vmem_limit,
            D=D, V=self.vocab_size,
        )
        return out2d.reshape(*lead, self.vocab_size)


# ---------------------------------------------------------------------------
# Demo / self-test
# ---------------------------------------------------------------------------
if __name__ == "__main__":
    # --- Primary check: module-sized shapes, f32 output, single-K-tile path.
    batch, seq, d_model, vocab_size = 2, 8, 32, 64
    key = jax.random.PRNGKey(0)
    kx, kparams = jax.random.split(key)

    x = jax.random.normal(kx, (batch, seq, d_model), dtype=jnp.float32)
    proj = Projection(d_model, vocab_size, key=kparams, out_dtype=jnp.float32)

    out = proj(x)
    jax.block_until_ready(out)
    assert out.shape == (batch, seq, vocab_size)

    w_t_bf16 = proj.w_padded[:d_model, :vocab_size]         # (D, V) bf16
    b_f32 = proj.b_padded[0, :vocab_size]                   # (V,) f32
    ref = jnp.dot(x.astype(jnp.bfloat16), w_t_bf16,
                  preferred_element_type=jnp.float32) + b_f32
    assert jnp.allclose(out, ref, atol=1e-2, rtol=1e-2)

    # Loose check vs pure-f32 nn.Linear semantics (bf16-input precision).
    ref_f32 = x @ w_t_bf16.astype(jnp.float32) + b_f32
    assert jnp.allclose(out, ref_f32, atol=5e-2, rtol=5e-2)

    # --- Secondary check: exercise the K-reduction grid axis + bf16 output
    #     (acc-scratch kernel) and the f32 direct-accumulate kernel.
    d2, v2 = 256, 256
    x2 = jax.random.normal(jax.random.PRNGKey(2), (2, 8, d2), dtype=jnp.float32)

    proj_bf16 = Projection(d2, v2, key=jax.random.PRNGKey(1),
                           out_dtype=jnp.bfloat16, tm=128, tn=128, tk=128)
    out_bf16 = proj_bf16(x2)
    jax.block_until_ready(out_bf16)
    ref2 = jnp.dot(x2.astype(jnp.bfloat16), proj_bf16.w_padded[:d2, :v2],
                   preferred_element_type=jnp.float32) + proj_bf16.b_padded[0, :v2]
    assert jnp.allclose(out_bf16.astype(jnp.float32),
                        ref2.astype(jnp.bfloat16).astype(jnp.float32),
                        atol=3e-2, rtol=3e-2)

    proj_f32 = Projection(d2, v2, key=jax.random.PRNGKey(1),
                          out_dtype=jnp.float32, tm=128, tn=128, tk=128)
    out_f32 = proj_f32(x2)
    jax.block_until_ready(out_f32)
    assert jnp.allclose(out_f32, ref2, atol=1e-2, rtol=1e-2)

    print("KERNEL_OK")
</pallas_src>

<mosaic_0001>
module attributes {stable_mosaic.version = 11 : i64} {
  func.func @_proj_kernel_single(%arg0: i32, %arg1: i32, %arg2: memref<128x128xbf16, #tpu.memory_space<vmem>>, %arg3: memref<128x128xbf16, #tpu.memory_space<vmem>>, %arg4: memref<1x128xf32, #tpu.memory_space<vmem>>, %arg5: memref<128x128xf32, #tpu.memory_space<vmem>>) attributes {dimension_semantics = [#tpu.dimension_semantics<parallel>, #tpu.dimension_semantics<parallel>], iteration_bounds = array<i64: 1, 1>, scalar_prefetch = 0 : i64, scratch_operands = 0 : i64, tpu.core_type = #tpu.core_type<tc>, window_params = [{transform_indices = @transform_0, window_bounds = array<i64: 128, 128>}, {transform_indices = @transform_1, window_bounds = array<i64: 128, 128>}, {transform_indices = @transform_2, window_bounds = array<i64: 1, 128>}, {transform_indices = @transform_3, window_bounds = array<i64: 128, 128>}]} {
    %c0 = arith.constant 0 : index
    %c0_0 = arith.constant 0 : index
    %0 = vector.load %arg2[%c0, %c0_0] : memref<128x128xbf16, #tpu.memory_space<vmem>>, vector<128x128xbf16>
    %c0_1 = arith.constant 0 : index
    %c0_2 = arith.constant 0 : index
    %1 = vector.load %arg3[%c0_1, %c0_2] : memref<128x128xbf16, #tpu.memory_space<vmem>>, vector<128x128xbf16>
    %cst = arith.constant dense<0.000000e+00> : vector<128x128xf32>
    %2 = tpu.matmul %0, %1, %cst {dimension_numbers = #tpu.dot_dimension_numbers<[1], [0], [0], [1], [0, 0, 1, 1], [], []>} : vector<128x128xbf16>, vector<128x128xbf16>, vector<128x128xf32> -> vector<128x128xf32>
    %c0_3 = arith.constant 0 : index
    %c0_4 = arith.constant 0 : index
    %3 = vector.load %arg4[%c0_3, %c0_4] : memref<1x128xf32, #tpu.memory_space<vmem>>, vector<1x128xf32>
    %4 = vector.broadcast %3 : vector<1x128xf32> to vector<128x128xf32>
    %5 = arith.addf %2, %4 : vector<128x128xf32>
    %c0_5 = arith.constant 0 : index
    %c0_6 = arith.constant 0 : index
    %6 = vector.load %arg5[%c0_5, %c0_6] : memref<128x128xf32, #tpu.memory_space<vmem>>, vector<128x128xf32>
    tpu.vector_store %arg5[%c0_5, %c0_6], %5 {strides = array<i32>} : memref<128x128xf32, #tpu.memory_space<vmem>>, vector<128x128xf32>,
    return
  }
  func.func @transform_0(%arg0: i32, %arg1: i32) -> (i32, i32) {
    %c0_i32 = arith.constant 0 : i32
    %c0_i32_0 = arith.constant 0 : i32
    return %arg1, %c0_i32 : i32, i32
  }
  func.func @transform_1(%arg0: i32, %arg1: i32) -> (i32, i32) {
    %c0_i32 = arith.constant 0 : i32
    %c0_i32_0 = arith.constant 0 : i32
    return %c0_i32, %arg0 : i32, i32
  }
  func.func @transform_2(%arg0: i32, %arg1: i32) -> (i32, i32) {
    %c0_i32 = arith.constant 0 : i32
    %c0_i32_0 = arith.constant 0 : i32
    return %c0_i32, %arg0 : i32, i32
  }
  func.func @transform_3(%arg0: i32, %arg1: i32) -> (i32, i32) {
    %c0_i32 = arith.constant 0 : i32
    return %arg1, %arg0 : i32, i32
  }
}

</mosaic_0001>

<llo_original>
// kernel: _projection_fwd.1
$region0: #{_projection_fwd.1}
  #allocation0 [shape = 'u32[]', space=smem, size = 0x4, offset = 0x4, fixed_abs, tag = 'smem constant byte address 0x4 - core index']
  #allocation1 [shape = 'u32[144,128]{1,0:T(1,128)}', space=vmem, size = 0x12000, scoped, tag = 'internal scratch']
  %s0 = inlined_call_operand.hbm [shape: bf16[128,128], index: 0, kind: input, shape index: {}]
  %s1 = inlined_call_operand.hbm [shape: bf16[128,128], index: 1, kind: input, shape index: {}]
  %s2 = inlined_call_operand.hbm [shape: f32[1,128], index: 2, kind: input, shape index: {}]
  %s3 = inlined_call_operand.hbm [shape: f32[128,128], index: 3, kind: output, shape index: {}]
  %s4 = sld [smem:[#allocation0]]
  $region34: #{_projection_fwd.1} parent=0
    _
  %s6 = ssub.s32 1, %s4
  %s7 = scalar_select 0, %s6, %s4
  $region1: #{_projection_fwd.1} parent=0
    #allocation2 [shape = 'u8[32768]{0}', space=vmem, size = 0x8000, scoped, tag = 'input window, operand 0, single buffered']
    #allocation3 [shape = 's32[1]{0}', space=sflag, size = 0x4, scoped, tag = 'scoped memory for _projection_fwd.1']
    #allocation4 [shape = 's32[1]{0}', space=sflag, size = 0x4, scoped, tag = 'scoped memory for _projection_fwd.1']
    #allocation5 [shape = 'u8[32768]{0}', space=vmem, size = 0x8000, scoped, tag = 'input window, operand 1, single buffered']
    #allocation6 [shape = 's32[1]{0}', space=sflag, size = 0x4, scoped, tag = 'scoped memory for _projection_fwd.1']
    #allocation7 [shape = 'u8[512]{0}', space=vmem, size = 0x400, scoped, tag = 'input window, operand 2, single buffered']
    #allocation8 [shape = 'u8[65536]{0}', space=vmem, size = 0x10000, scoped, tag = 'output window, operand 0, single buffered']
    %8 = vsyncpa [#allocation3], 0
    %9 = vsyncpa [#allocation6], 0
    %10 = vsyncpa [#allocation4], 0
    // Predicated region
    $region2: #{_projection_fwd.1} parent=1 // pred_check
      _
    $region3: #{_projection_fwd.1} parent=1 // pred_check_branch
      %12 = sbr.rel (0) target = $region5
    $region4: #{_projection_fwd.1} parent=1 // pred_region
      %s14 = ssub.s32 1024, 1024
      %15 = vsyncadd [#allocation3], %s14
      %s16 = sshll.u32 [#allocation2], 4
      %s17 = int_to_ptr.vmem [resolvable:$true] %s16
      %22 = dma.hbm_to_vmem [thread:$0]  %s0, 1024, %s17, [#allocation3], 64, 64, 4
    $region5: #{_projection_fwd.1} parent=1 // pred_fallthru
      _
    // Predicated region
    $region6: #{_projection_fwd.1} parent=1 // pred_check
      _
    $region7: #{_projection_fwd.1} parent=1 // pred_check_branch
      %24 = sbr.rel (0) target = $region9
    $region8: #{_projection_fwd.1} parent=1 // pred_region
      %s26 = ssub.s32 1024, 1024
      %27 = vsyncadd [#allocation6], %s26
      %s28 = sshll.u32 [#allocation5], 4
      %s29 = int_to_ptr.vmem [resolvable:$true] %s28
      %34 = dma.hbm_to_vmem [thread:$0]  %s1, 1024, %s29, [#allocation6], 64, 64, 4
    $region9: #{_projection_fwd.1} parent=1 // pred_fallthru
      _
    // Predicated region
    $region10: #{_projection_fwd.1} parent=1 // pred_check
      _
    $region11: #{_projection_fwd.1} parent=1 // pred_check_branch
      %36 = sbr.rel (0) target = $region13
    $region12: #{_projection_fwd.1} parent=1 // pred_region
      %s38 = ssub.s32 16, 16
      %39 = vsyncadd [#allocation6], %s38
      %s41 = sshll.u32 [#allocation7], 4
      %s42 = int_to_ptr.vmem [resolvable:$true] %s41
      %44 = dma.hbm_to_vmem [thread:$0]  %s2, 16, %s42, [#allocation6]
    $region13: #{_projection_fwd.1} parent=1 // pred_fallthru
      _
    // Predicated region
    $region14: #{_projection_fwd.1} parent=1 // pred_check
      _
    $region15: #{_projection_fwd.1} parent=1 // pred_check_branch
      %46 = sbr.rel (0) target = $region17
    $region16: #{_projection_fwd.1} parent=1 // pred_region
      %47 = dma.done [#allocation3], 1024
    $region17: #{_projection_fwd.1} parent=1 // pred_fallthru
      _
    // Predicated region
    $region18: #{_projection_fwd.1} parent=1 // pred_check
      _
    $region19: #{_projection_fwd.1} parent=1 // pred_check_branch
      %49 = sbr.rel (0) target = $region21
    $region20: #{_projection_fwd.1} parent=1 // pred_region
      %50 = dma.done [#allocation6], 1024
    $region21: #{_projection_fwd.1} parent=1 // pred_fallthru
      _
    // Predicated region
    $region22: #{_projection_fwd.1} parent=1 // pred_check
      _
    $region23: #{_projection_fwd.1} parent=1 // pred_check_branch
      %52 = sbr.rel (0) target = $region25
    $region24: #{_projection_fwd.1} parent=1 // pred_region
      %53 = dma.done [#allocation6], 16
    $region25: #{_projection_fwd.1} parent=1 // pred_fallthru
      _
    %v55 = vld [vmem:[#allocation2] sm:$0xf]
    %v56 = vld [vmem:[#allocation2 + $0x4] sm:$0xf]
    %v57 = vld [vmem:[#allocation2 + $0x8] sm:$0xf]
    %v58 = vld [vmem:[#allocation2 + $0xc] sm:$0xf]
    %v59 = vld [vmem:[#allocation2 + $0x10] sm:$0xf]
    %v60 = vld [vmem:[#allocation2 + $0x14] sm:$0xf]
    %v61 = vld [vmem:[#allocation2 + $0x18] sm:$0xf]
    %v62 = vld [vmem:[#allocation2 + $0x1c] sm:$0xf]
    %v63 = vld [vmem:[#allocation2 + $0x20] sm:$0xf]
    %v64 = vld [vmem:[#allocation2 + $0x24] sm:$0xf]
    %v65 = vld [vmem:[#allocation2 + $0x28] sm:$0xf]
    %v66 = vld [vmem:[#allocation2 + $0x2c] sm:$0xf]
    %v67 = vld [vmem:[#allocation2 + $0x30] sm:$0xf]
    %v68 = vld [vmem:[#allocation2 + $0x34] sm:$0xf]
    %v69 = vld [vmem:[#allocation2 + $0x38] sm:$0xf]
    %v70 = vld [vmem:[#allocation2 + $0x3c] sm:$0xf]
    %v71 = vld [vmem:[#allocation5] sm:$0xf]
    %v72 = vld [vmem:[#allocation5 + $0x4] sm:$0xf]
    %v73 = vld [vmem:[#allocation5 + $0x8] sm:$0xf]
    %v74 = vld [vmem:[#allocation5 + $0xc] sm:$0xf]
    %v75 = vld [vmem:[#allocation5 + $0x10] sm:$0xf]
    %v76 = vld [vmem:[#allocation5 + $0x14] sm:$0xf]
    %v77 = vld [vmem:[#allocation5 + $0x18] sm:$0xf]
    %v78 = vld [vmem:[#allocation5 + $0x1c] sm:$0xf]
    %v79 = vld [vmem:[#allocation5 + $0x20] sm:$0xf]
    %v80 = vld [vmem:[#allocation5 + $0x24] sm:$0xf]
    %v81 = vld [vmem:[#allocation5 + $0x28] sm:$0xf]
    %v82 = vld [vmem:[#allocation5 + $0x2c] sm:$0xf]
    %v83 = vld [vmem:[#allocation5 + $0x30] sm:$0xf]
    %v84 = vld [vmem:[#allocation5 + $0x34] sm:$0xf]
    %v85 = vld [vmem:[#allocation5 + $0x38] sm:$0xf]
    %v86 = vld [vmem:[#allocation5 + $0x3c] sm:$0xf]
    %v87 = vld [vmem:[#allocation7] sm:$0x1]
    %v89 = vlaneseq
    %v90 = vshrl.u32 %v89, 7
    %v91 = vsub.s32 0, %v90
    %v92 = vrot.slane %v87, %v91
    %v110 = vunpack.c.l.b16 %v55
    %v111 = vunpack.c.l.b16 %v56
    %v112 = vunpack.c.l.b16 %v57
    %v113 = vunpack.c.l.b16 %v58
    %v114 = vunpack.c.l.b16 %v59
    %v115 = vunpack.c.l.b16 %v60
    %v116 = vunpack.c.l.b16 %v61
    %v117 = vunpack.c.l.b16 %v62
    %v118 = vunpack.c.l.b16 %v63
    %v119 = vunpack.c.l.b16 %v64
    %v120 = vunpack.c.l.b16 %v65
    %v121 = vunpack.c.l.b16 %v66
    %v122 = vunpack.c.l.b16 %v67
    %v123 = vunpack.c.l.b16 %v68
    %v124 = vunpack.c.l.b16 %v69
    %v125 = vunpack.c.l.b16 %v70
    %v126 = vpack.c.b16 %v111, %v110
    %v127 = vpack.c.b16 %v113, %v112
    %v128 = vpack.c.b16 %v115, %v114
    %v129 = vpack.c.b16 %v117, %v116
    %v130 = vpack.c.b16 %v119, %v118
    %v131 = vpack.c.b16 %v121, %v120
    %v132 = vpack.c.b16 %v123, %v122
    %v133 = vpack.c.b16 %v125, %v124
    %v158 = vunpack.c.l.b16 %v71
    %v159 = vunpack.c.l.b16 %v72
    %v160 = vunpack.c.l.b16 %v73
    %v161 = vunpack.c.l.b16 %v74
    %v162 = vunpack.c.l.b16 %v75
    %v163 = vunpack.c.l.b16 %v76
    %v164 = vunpack.c.l.b16 %v77
    %v165 = vunpack.c.l.b16 %v78
    %v166 = vunpack.c.l.b16 %v79
    %v167 = vunpack.c.l.b16 %v80
    %v168 = vunpack.c.l.b16 %v81
    %v169 = vunpack.c.l.b16 %v82
    %v170 = vunpack.c.l.b16 %v83
    %v171 = vunpack.c.l.b16 %v84
    %v172 = vunpack.c.l.b16 %v85
    %v173 = vunpack.c.l.b16 %v86
    %v174 = vpack.c.b16 %v159, %v158
    %v175 = vpack.c.b16 %v161, %v160
    %v176 = vpack.c.b16 %v163, %v162
    %v177 = vpack.c.b16 %v165, %v164
    %v178 = vpack.c.b16 %v167, %v166
    %v179 = vpack.c.b16 %v169, %v168
    %v180 = vpack.c.b16 %v171, %v170
    %v181 = vpack.c.b16 %v173, %v172
    %190 = vmatprep.subr.bf16.mxu0 0
    %191 = vmatpush1.bf16.msra.mxu0 %v174
    %192 = vmatprep.subr.bf16.mxu0 0
    %193 = vmatpush1.bf16.msra.mxu0 %v175
    %194 = vmatprep.subr.bf16.mxu0 0
    %195 = vmatpush1.bf16.msra.mxu0 %v176
    %196 = vmatprep.subr.bf16.mxu0 0
    %197 = vmatpush1.bf16.msra.mxu0 %v177
    %198 = vmatprep.subr.bf16.mxu0 0
    %199 = vmatpush1.bf16.msra.mxu0 %v178
    %200 = vmatprep.subr.bf16.mxu0 0
    %201 = vmatpush1.bf16.msra.mxu0 %v179
    %202 = vmatprep.subr.bf16.mxu0 0
    %203 = vmatpush1.bf16.msra.mxu0 %v180
    %204 = vmatprep.subr.bf16.mxu0 0
    %205 = vmatpush1.bf16.msra.mxu0 %v181
    %206 = vmatprep.subr.bf16.mxu0 0
    %207 = vmatpush1.bf16.msra.mxu0 0
    %208 = vmatprep.subr.bf16.mxu0 0
    %209 = vmatpush1.bf16.msra.mxu0 0
    %210 = vmatprep.subr.bf16.mxu0 0
    %211 = vmatpush1.bf16.msra.mxu0 0
    %212 = vmatprep.subr.bf16.mxu0 0
    %213 = vmatpush1.bf16.msra.mxu0 0
    %214 = vmatprep.subr.bf16.mxu0 0
    %215 = vmatpush1.bf16.msra.mxu0 0
    %216 = vmatprep.subr.bf16.mxu0 0
    %217 = vmatpush1.bf16.msra.mxu0 0
    %218 = vmatprep.subr.bf16.mxu0 0
    %219 = vmatpush1.bf16.msra.mxu0 0
    %220 = vmatprep.subr.bf16.mxu0 0
    %221 = vmatpush1.bf16.msra.mxu0 0
    %222 = vmatprep.mubr.bf16.mxu0 0
    %223 = vmatmul.mubr.bf16.gmra.mrb[0].mxu0 %v126
    %v224 = vpop.f32.mrb[0].mxu0
    %v225 = vadd.f32 %v92, %v224
    %v226 = vpop.f32.mrb[0].mxu0
    %v227 = vpop.f32.mrb[0].mxu0
    %v228 = vadd.f32 %v92, %v227
    %v229 = vpop.f32.mrb[0].mxu0
    %230 = vmatprep.mubr.bf16.mxu0 0
    %231 = vmatmul.mubr.bf16.gmra.mrb[0].mxu0 %v127
    %v232 = vpop.f32.mrb[0].mxu0
    %v233 = vadd.f32 %v92, %v232
    %v234 = vpop.f32.mrb[0].mxu0
    %v235 = vpop.f32.mrb[0].mxu0
    %v236 = vadd.f32 %v92, %v235
    %v237 = vpop.f32.mrb[0].mxu0
    %238 = vmatprep.mubr.bf16.mxu0 0
    %239 = vmatmul.mubr.bf16.gmra.mrb[0].mxu0 %v128
    %v240 = vpop.f32.mrb[0].mxu0
    %v241 = vadd.f32 %v92, %v240
    %v242 = vpop.f32.mrb[0].mxu0
    %v243 = vpop.f32.mrb[0].mxu0
    %v244 = vadd.f32 %v92, %v243
    %v245 = vpop.f32.mrb[0].mxu0
    %246 = vmatprep.mubr.bf16.mxu0 0
    %247 = vmatmul.mubr.bf16.gmra.mrb[0].mxu0 %v129
    %v248 = vpop.f32.mrb[0].mxu0
    %v249 = vadd.f32 %v92, %v248
    %v250 = vpop.f32.mrb[0].mxu0
    %v251 = vpop.f32.mrb[0].mxu0
    %v252 = vadd.f32 %v92, %v251
    %v253 = vpop.f32.mrb[0].mxu0
    %254 = vmatprep.mubr.bf16.mxu0 0
    %255 = vmatmul.mubr.bf16.gmra.mrb[0].mxu0 %v130
    %v256 = vpop.f32.mrb[0].mxu0
    %v257 = vadd.f32 %v92, %v256
    %v258 = vpop.f32.mrb[0].mxu0
    %v259 = vpop.f32.mrb[0].mxu0
    %v260 = vadd.f32 %v92, %v259
    %v261 = vpop.f32.mrb[0].mxu0
    %262 = vmatprep.mubr.bf16.mxu0 0
    %263 = vmatmul.mubr.bf16.gmra.mrb[0].mxu0 %v131
    %v264 = vpop.f32.mrb[0].mxu0
    %v265 = vadd.f32 %v92, %v264
    %v266 = vpop.f32.mrb[0].mxu0
    %v267 = vpop.f32.mrb[0].mxu0
    %v268 = vadd.f32 %v92, %v267
    %v269 = vpop.f32.mrb[0].mxu0
    %270 = vmatprep.mubr.bf16.mxu0 0
    %271 = vmatmul.mubr.bf16.gmra.mrb[0].mxu0 %v132
    %v272 = vpop.f32.mrb[0].mxu0
    %v273 = vadd.f32 %v92, %v272
    %v274 = vpop.f32.mrb[0].mxu0
    %v275 = vpop.f32.mrb[0].mxu0
    %v276 = vadd.f32 %v92, %v275
    %v277 = vpop.f32.mrb[0].mxu0
    %278 = vmatprep.mubr.bf16.mxu0 0
    %279 = vmatmul.mubr.bf16.gmra.mrb[0].mxu0 %v133
    %v280 = vpop.f32.mrb[0].mxu0
    %v281 = vadd.f32 %v92, %v280
    %v282 = vpop.f32.mrb[0].mxu0
    %v283 = vpop.f32.mrb[0].mxu0
    %v284 = vadd.f32 %v92, %v283
    %v285 = vpop.f32.mrb[0].mxu0
    %286 = vdwg.mxu0
    %287 = vst [vmem:[#allocation8] sm:$0xff] %v225
    %288 = vst [vmem:[#allocation8 + $0x8] sm:$0xff] %v228
    %289 = vst [vmem:[#allocation8 + $0x10] sm:$0xff] %v233
    %290 = vst [vmem:[#allocation8 + $0x18] sm:$0xff] %v236
    %291 = vst [vmem:[#allocation8 + $0x20] sm:$0xff] %v241
    %292 = vst [vmem:[#allocation8 + $0x28] sm:$0xff] %v244
    %293 = vst [vmem:[#allocation8 + $0x30] sm:$0xff] %v249
    %294 = vst [vmem:[#allocation8 + $0x38] sm:$0xff] %v252
    %295 = vst [vmem:[#allocation8 + $0x40] sm:$0xff] %v257
    %296 = vst [vmem:[#allocation8 + $0x48] sm:$0xff] %v260
    %297 = vst [vmem:[#allocation8 + $0x50] sm:$0xff] %v265
    %298 = vst [vmem:[#allocation8 + $0x58] sm:$0xff] %v268
    %299 = vst [vmem:[#allocation8 + $0x60] sm:$0xff] %v273
    %300 = vst [vmem:[#allocation8 + $0x68] sm:$0xff] %v276
    %301 = vst [vmem:[#allocation8 + $0x70] sm:$0xff] %v281
    %302 = vst [vmem:[#allocation8 + $0x78] sm:$0xff] %v284
    // Predicated region
    $region26: #{_projection_fwd.1} parent=1 // pred_check
      _
    $region27: #{_projection_fwd.1} parent=1 // pred_check_branch
      %304 = sbr.rel (0) target = $region29
    $region28: #{_projection_fwd.1} parent=1 // pred_region
      %s306 = ssub.s32 2048, 2048
      %307 = vsyncadd [#allocation4], %s306
      %s308 = sshll.u32 [#allocation8], 4
      %s309 = int_to_ptr.vmem [resolvable:$true] %s308
      %314 = dma.vmem_to_hbm [thread:$0]  %s309, 2048, %s3, [#allocation4], 128, 128, 8
    $region29: #{_projection_fwd.1} parent=1 // pred_fallthru
      _
    // Predicated region
    $region30: #{_projection_fwd.1} parent=1 // pred_check
      _
    $region31: #{_projection_fwd.1} parent=1 // pred_check_branch
      %316 = sbr.rel (0) target = $region33
    $region32: #{_projection_fwd.1} parent=1 // pred_region
      %317 = dma.done [#allocation4], 2048
    $region33: #{_projection_fwd.1} parent=1 // pred_fallthru
      _
    %318 = vsyncpa [#allocation3], 1
    %319 = vsyncpa [#allocation6], 1
    %320 = vsyncpa [#allocation4], 1

</llo_original>
